<compile_context>
chip_gen: v5e
topology: v5e:2x2
jax: 0.10.0
libtpu: 0.0.40
codegen_flags: <defaults>
</compile_context>

<pallas_src>
import math
import numpy as np
import jax
import jax.numpy as jnp
from jax import lax
from jax.experimental import pallas as pl
from jax.experimental.pallas import tpu as pltpu

# Small synthetic shapes consistent with the module's forward pass.
B, S, H, F, V = 2, 8, 32, 128, 64   # batch, seq, hidden, ffn, vocab
R = B * S                           # total rows (B*S)
EPS = 1e-12                         # BERT-style layernorm eps
NEG_MASK = -1e30                    # large finite negative for the attention mask

# Rows of the packed (8, 128) vector slab (biases + layernorm params).
ROW_BQKV, ROW_BO, ROW_G1, ROW_BE1, ROW_B1, ROW_B2, ROW_G2, ROW_BE2 = range(8)


# ----------------------------------------------------------------------------
# Fused Pallas kernel factory (single step, full-array VMEM blocks, no grid).
# ----------------------------------------------------------------------------
def _make_kernel(with_pool):
    inv_h = 1.0 / H

    def kernel(ids_ref, emb_ref, pos_ref, wqkv_ref, wo_ref, w1_ref, w2_ref,
               vecs_ref, mask_ref, *rest):
        if with_pool:
            wpt_ref, gsel_ref, out_ref = rest
        else:
            (out_ref,) = rest

        vecs = vecs_ref[...]                               # (8, 128) packed vecs
        bqkv = vecs[ROW_BQKV:ROW_BQKV + 1, :3 * H]         # (1, 3H) (Q part pre-scaled)
        bo   = vecs[ROW_BO:ROW_BO + 1, :H]
        g1   = vecs[ROW_G1:ROW_G1 + 1, :H]
        be1  = vecs[ROW_BE1:ROW_BE1 + 1, :H]
        b1   = vecs[ROW_B1:ROW_B1 + 1, :F]
        b2   = vecs[ROW_B2:ROW_B2 + 1, :H]
        g2   = vecs[ROW_G2:ROW_G2 + 1, :H]
        be2  = vecs[ROW_BE2:ROW_BE2 + 1, :H]

        # Embedding gather fused in-kernel: one-hot (R,V) built from a lane iota
        # and the int32 ids, then a tiny matmul on the otherwise-idle MXU.
        ids = ids_ref[...]                                 # (R, 1) int32
        vocab_iota = lax.broadcasted_iota(jnp.int32, (R, V), 1)
        onehot = jnp.where(vocab_iota == ids, 1.0, 0.0)    # (R, V) f32
        x = jnp.dot(onehot, emb_ref[...],
                    preferred_element_type=jnp.float32) + pos_ref[...]   # (R, H)

        # Fused QKV projection; 1/sqrt(H) already folded into Q weights + bias.
        qkv = jnp.dot(x, wqkv_ref[...], preferred_element_type=jnp.float32) + bqkv
        q = qkv[:, 0:H]
        k = qkv[:, H:2 * H]
        v = qkv[:, 2 * H:3 * H]

        # Single batched attention pass with a block-diagonal additive mask
        # (per-batch softmax is exactly recovered: off-block probs underflow to 0).
        s = lax.dot_general(q, k, (((1,), (1,)), ((), ())),
                            preferred_element_type=jnp.float32)          # (R, R)
        s = s + mask_ref[...]
        s = s - jnp.max(s, axis=-1, keepdims=True)
        p = jnp.exp(s)
        # softmax divide -> EUP approximate reciprocal (off the VALU slot).
        p = p * pl.reciprocal(jnp.sum(p, axis=-1, keepdims=True), approx=True)
        ctx = jnp.dot(p, v, preferred_element_type=jnp.float32)          # (R, H)

        attn = jnp.dot(ctx, wo_ref[...], preferred_element_type=jnp.float32) + bo

        def layernorm(h, g, be):
            # Two independent XLU reductions; var = E[x^2] - mu^2 (shorter chain).
            sh  = jnp.sum(h, axis=-1, keepdims=True)
            sh2 = jnp.sum(h * h, axis=-1, keepdims=True)
            mu  = sh * inv_h
            var = sh2 * inv_h - mu * mu
            return (h - mu) * lax.rsqrt(var + EPS) * g + be

        h1 = layernorm(x + attn, g1, be1)

        # feed-forward
        # TODO(synk): torch.nn.GELU default is exact erf; tanh approximation kept
        # here for EUP lowering (matches the in-script JAX reference).
        f = jnp.dot(h1, w1_ref[...], preferred_element_type=jnp.float32) + b1
        f = jax.nn.gelu(f, approximate=True)
        f = jnp.dot(f, w2_ref[...], preferred_element_type=jnp.float32) + b2

        h2 = layernorm(h1 + f, g2, be2)                                   # (R, H)

        if with_pool:
            # AdaptiveAvgPool2d((H, 1)) epilogue in one pass (linearity):
            #   pooled[b, :] = sum_s W_pool[:, s] * mean_lane(h2[b*S + s, :])
            # = one lane-reduce + one broadcast-mul + one tiny MXU matmul.
            rmean = jnp.sum(h2, axis=-1, keepdims=True) * inv_h           # (R, 1)
            weighted = wpt_ref[...] * rmean                               # (R, H)
            out_ref[...] = jnp.dot(gsel_ref[...], weighted,
                                   preferred_element_type=jnp.float32)   # (B, H)
        else:
            out_ref[...] = h2                                             # (R, H)

    return kernel


def _build_call(with_pool):
    vmem = pl.BlockSpec(memory_space=pltpu.MemorySpace.VMEM)
    n_in = 11 if with_pool else 9
    out_shape = (jax.ShapeDtypeStruct((B, H), jnp.float32) if with_pool
                 else jax.ShapeDtypeStruct((R, H), jnp.float32))

    flops = (2 * R * V * H            # one-hot embedding gather
             + 2 * R * H * 3 * H      # fused QKV
             + 2 * R * R * H          # scores
             + 2 * R * R * H          # context
             + 2 * R * H * H          # wo
             + 2 * R * H * F          # w1
             + 2 * R * F * H)         # w2
    if with_pool:
        flops += 2 * B * R * H
    transcendentals = R * R + R * F + 2 * R + R
    in_bytes = (R * 1 * 4 + V * H * 4 + R * H * 4 + H * 3 * H * 4 + H * H * 4
                + H * F * 4 + F * H * 4 + 8 * 128 * 4 + R * R * 4)
    if with_pool:
        in_bytes += R * H * 4 + B * R * 4
    out_bytes = (B * H * 4) if with_pool else (R * H * 4)

    return pl.pallas_call(
        _make_kernel(with_pool),
        out_shape=out_shape,
        in_specs=[vmem] * n_in,
        out_specs=vmem,
        cost_estimate=pl.CostEstimate(flops=flops,
                                      transcendentals=transcendentals,
                                      bytes_accessed=in_bytes + out_bytes),
    )


_hidden_call = _build_call(False)   # pooling=False -> last_hidden_state (R, H)
_pooled_call = _build_call(True)    # pooling=True  -> pooled (B, H)


# ----------------------------------------------------------------------------
# Glue: parameters, packing, pooling/mask matrices, plain-JAX reference.
# ----------------------------------------------------------------------------
def adaptive_avgpool_matrix(in_size, out_size):
    # Same bin rule as torch.nn.AdaptiveAvgPool*d.
    w = np.zeros((out_size, in_size), dtype=np.float32)
    for i in range(out_size):
        start = (i * in_size) // out_size
        end = math.ceil((i + 1) * in_size / out_size)
        w[i, start:end] = 1.0 / (end - start)
    return jnp.asarray(w)


def init_params(key):
    ks = jax.random.split(key, 20)
    sc = 0.05
    def mat(k, shape): return (jax.random.normal(k, shape) * sc).astype(jnp.float32)
    emb = mat(ks[0], (V, H))
    pos = mat(ks[1], (S, H))
    wq, wk, wv, wo = (mat(ks[i], (H, H)) for i in range(2, 6))
    bq, bk, bv, bo = (mat(ks[i], (1, H)) for i in range(6, 10))
    g1 = jnp.ones((1, H), jnp.float32); be1 = jnp.zeros((1, H), jnp.float32)
    w1 = mat(ks[10], (H, F)); b1 = mat(ks[11], (1, F))
    w2 = mat(ks[12], (F, H)); b2 = mat(ks[13], (1, H))
    g2 = jnp.ones((1, H), jnp.float32); be2 = jnp.zeros((1, H), jnp.float32)
    enc_params = (wq, wk, wv, wo, bq, bk, bv, bo, g1, be1, w1, b1, w2, b2, g2, be2)
    return emb, pos, enc_params


def pack_params(enc_params):
    """Fuse QKV (with 1/sqrt(H) folded into Q) and pack vectors into (8,128)."""
    (wq, wk, wv, wo, bq, bk, bv, bo, g1, be1, w1, b1, w2, b2, g2, be2) = enc_params
    inv_sqrt_h = 1.0 / math.sqrt(H)
    wq = wq * inv_sqrt_h                   # fold attention scale host-side
    bq = bq * inv_sqrt_h
    wqkv = jnp.concatenate([wq, wk, wv], axis=1)                     # (H, 3H)
    bqkv = np.concatenate([np.asarray(bq), np.asarray(bk), np.asarray(bv)], axis=1)
    slab = np.zeros((8, 128), np.float32)
    rows = [bqkv, bo, g1, be1, b1, b2, g2, be2]
    for i, r in enumerate(rows):
        r = np.asarray(r).reshape(-1)
        slab[i, :r.shape[0]] = r
    return wqkv, wo, w1, w2, jnp.asarray(slab)


def build_attention_mask():
    """Block-diagonal additive mask: 0 within a batch's SxS block, -1e30 outside."""
    m = np.full((R, R), NEG_MASK, np.float32)
    for b in range(B):
        m[b * S:(b + 1) * S, b * S:(b + 1) * S] = 0.0
    return jnp.asarray(m)


def build_pool_aux(w_pool):
    """wpt_tiled: (R,H) tile of W_pool^T; gsel: (B,R) batch-block selector."""
    wpt_tiled = np.tile(np.asarray(w_pool).T, (B, 1)).astype(np.float32)  # (R, H)
    gsel = np.zeros((B, R), np.float32)
    for b in range(B):
        gsel[b, b * S:(b + 1) * S] = 1.0
    return jnp.asarray(wpt_tiled), jnp.asarray(gsel)


def reference_encoder(x, params):
    (wq, wk, wv, wo, bq, bk, bv, bo, g1, be1, w1, b1, w2, b2, g2, be2) = params
    def ln(h, g, be):
        mu = jnp.mean(h, axis=-1, keepdims=True)
        var = jnp.mean((h - mu) ** 2, axis=-1, keepdims=True)
        return (h - mu) * lax.rsqrt(var + EPS) * g + be
    q = x @ wq + bq; k = x @ wk + bk; v = x @ wv + bv
    s = jnp.einsum('bsh,bth->bst', q, k) / math.sqrt(H)
    a = jax.nn.softmax(s, axis=-1)
    out = jnp.einsum('bst,bth->bsh', a, v) @ wo + bo
    h1 = ln(x + out, g1, be1)
    f = jax.nn.gelu(h1 @ w1 + b1, approximate=True) @ w2 + b2
    return ln(h1 + f, g2, be2)


def calbert_forward(input_ids, emb, pos_tiled, wqkv, wo, w1, w2, vecs, mask,
                    wpt_tiled, gsel, pooling=False):
    """CalBERT.forward: batch embeddings -> optional AdaptiveAvgPool2d((H,1))."""
    # TODO(synk): HF tokenizer / pretrained AutoModel loading and save()/load()
    # have no Pallas equivalent; replaced by a deterministic synthetic encoder.
    ids2d = input_ids.reshape(R, 1).astype(jnp.int32)
    common = (ids2d, emb, pos_tiled, wqkv, wo, w1, w2, vecs, mask)
    if pooling:
        pooled = _pooled_call(*common, wpt_tiled, gsel)     # (B, H)
        return pooled[..., None]                            # (B, H, 1)
    hidden2d = _hidden_call(*common)                        # (R, H)
    return hidden2d.reshape(B, S, H)                        # last_hidden_state


if __name__ == "__main__":
    key = jax.random.PRNGKey(0)
    kp, kid = jax.random.split(key)
    emb, pos, enc_params = init_params(kp)
    input_ids = jax.random.randint(kid, (B, S), 0, V)

    w_pool = adaptive_avgpool_matrix(S, H)                  # (H, S)
    wqkv, wo_w, w1_w, w2_w, vecs = pack_params(enc_params)
    mask = build_attention_mask()
    wpt_tiled, gsel = build_pool_aux(w_pool)
    pos_tiled = jnp.tile(pos, (B, 1))                       # (R, H)

    # pooling=False path (last_hidden_state)
    hidden = calbert_forward(input_ids, emb, pos_tiled, wqkv, wo_w, w1_w, w2_w,
                             vecs, mask, wpt_tiled, gsel, pooling=False)
    hidden = jax.block_until_ready(hidden)

    # pooling=True path (AdaptiveAvgPool2d((H, 1)) -> (B, H, 1))
    pooled = calbert_forward(input_ids, emb, pos_tiled, wqkv, wo_w, w1_w, w2_w,
                             vecs, mask, wpt_tiled, gsel, pooling=True)
    pooled = jax.block_until_ready(pooled)

    # Plain-JAX reference check of both paths.
    x0 = jnp.take(emb, input_ids, axis=0) + pos[None]
    h_ref = reference_encoder(x0, enc_params)
    pooled_ref = jnp.einsum('os,bsh->boh', w_pool, h_ref).mean(axis=-1, keepdims=True)

    assert hidden.shape == (B, S, H) and pooled.shape == (B, H, 1)
    # Tolerance accounts for the EUP approximate reciprocal in softmax and the
    # E[x^2]-mu^2 layernorm formulation.
    np.testing.assert_allclose(np.asarray(hidden), np.asarray(h_ref),
                               atol=2e-3, rtol=2e-3)
    np.testing.assert_allclose(np.asarray(pooled), np.asarray(pooled_ref),
                               atol=2e-3, rtol=2e-3)
    print("KERNEL_OK")
</pallas_src>

<mosaic_0001>
module attributes {stable_mosaic.version = 11 : i64} {
  func.func @kernel(%arg0: memref<16x1xi32, #tpu.memory_space<vmem>>, %arg1: memref<64x32xf32, #tpu.memory_space<vmem>>, %arg2: memref<16x32xf32, #tpu.memory_space<vmem>>, %arg3: memref<32x96xf32, #tpu.memory_space<vmem>>, %arg4: memref<32x32xf32, #tpu.memory_space<vmem>>, %arg5: memref<32x128xf32, #tpu.memory_space<vmem>>, %arg6: memref<128x32xf32, #tpu.memory_space<vmem>>, %arg7: memref<8x128xf32, #tpu.memory_space<vmem>>, %arg8: memref<16x16xf32, #tpu.memory_space<vmem>>, %arg9: memref<16x32xf32, #tpu.memory_space<vmem>>) attributes {dimension_semantics = [], scalar_prefetch = 0 : i64, scratch_operands = 0 : i64, tpu.core_type = #tpu.core_type<tc>} {
    %c0 = arith.constant 0 : index
    %c0_0 = arith.constant 0 : index
    %0 = vector.load %arg7[%c0, %c0_0] : memref<8x128xf32, #tpu.memory_space<vmem>>, vector<8x128xf32>
    %1 = vector.extract_strided_slice %0 {offsets = [0, 0], sizes = [1, 96], strides = [1, 1]} : vector<8x128xf32> to vector<1x96xf32>
    %2 = vector.extract_strided_slice %0 {offsets = [1, 0], sizes = [1, 32], strides = [1, 1]} : vector<8x128xf32> to vector<1x32xf32>
    %3 = vector.extract_strided_slice %0 {offsets = [2, 0], sizes = [1, 32], strides = [1, 1]} : vector<8x128xf32> to vector<1x32xf32>
    %4 = vector.extract_strided_slice %0 {offsets = [3, 0], sizes = [1, 32], strides = [1, 1]} : vector<8x128xf32> to vector<1x32xf32>
    %5 = vector.extract_strided_slice %0 {offsets = [4, 0], sizes = [1, 128], strides = [1, 1]} : vector<8x128xf32> to vector<1x128xf32>
    %6 = vector.extract_strided_slice %0 {offsets = [5, 0], sizes = [1, 32], strides = [1, 1]} : vector<8x128xf32> to vector<1x32xf32>
    %7 = vector.extract_strided_slice %0 {offsets = [6, 0], sizes = [1, 32], strides = [1, 1]} : vector<8x128xf32> to vector<1x32xf32>
    %8 = vector.extract_strided_slice %0 {offsets = [7, 0], sizes = [1, 32], strides = [1, 1]} : vector<8x128xf32> to vector<1x32xf32>
    %c0_1 = arith.constant 0 : index
    %c0_2 = arith.constant 0 : index
    %9 = vector.load %arg0[%c0_1, %c0_2] : memref<16x1xi32, #tpu.memory_space<vmem>>, vector<16x1xi32>
    %10 = tpu.iota {dimensions = array<i32: 1>} : vector<16x64xi32>
    %11 = vector.broadcast %9 : vector<16x1xi32> to vector<16x64xi32>
    %12 = arith.cmpi eq, %10, %11 : vector<16x64xi32>
    %cst = arith.constant 1.000000e+00 : f32
    %cst_3 = arith.constant 0.000000e+00 : f32
    %13 = vector.broadcast %cst : f32 to vector<16x64xf32>
    %14 = vector.broadcast %cst_3 : f32 to vector<16x64xf32>
    %15 = arith.select %12, %13, %14 : vector<16x64xi1>, vector<16x64xf32>
    %c0_4 = arith.constant 0 : index
    %c0_5 = arith.constant 0 : index
    %16 = vector.load %arg1[%c0_4, %c0_5] : memref<64x32xf32, #tpu.memory_space<vmem>>, vector<64x32xf32>
    %cst_6 = arith.constant dense<0.000000e+00> : vector<16x32xf32>
    %17 = tpu.matmul %15, %16, %cst_6 {dimension_numbers = #tpu.dot_dimension_numbers<[1], [0], [0], [1], [0, 0, 1, 1], [], []>} : vector<16x64xf32>, vector<64x32xf32>, vector<16x32xf32> -> vector<16x32xf32>
    %c0_7 = arith.constant 0 : index
    %c0_8 = arith.constant 0 : index
    %18 = vector.load %arg2[%c0_7, %c0_8] : memref<16x32xf32, #tpu.memory_space<vmem>>, vector<16x32xf32>
    %19 = arith.addf %17, %18 : vector<16x32xf32>
    %c0_9 = arith.constant 0 : index
    %c0_10 = arith.constant 0 : index
    %20 = vector.load %arg3[%c0_9, %c0_10] : memref<32x96xf32, #tpu.memory_space<vmem>>, vector<32x96xf32>
    %cst_11 = arith.constant dense<0.000000e+00> : vector<16x96xf32>
    %21 = tpu.matmul %19, %20, %cst_11 {dimension_numbers = #tpu.dot_dimension_numbers<[1], [0], [0], [1], [0, 0, 1, 1], [], []>} : vector<16x32xf32>, vector<32x96xf32>, vector<16x96xf32> -> vector<16x96xf32>
    %22 = vector.broadcast %1 : vector<1x96xf32> to vector<16x96xf32>
    %23 = arith.addf %21, %22 : vector<16x96xf32>
    %24 = vector.extract_strided_slice %23 {offsets = [0, 0], sizes = [16, 32], strides = [1, 1]} : vector<16x96xf32> to vector<16x32xf32>
    %25 = vector.extract_strided_slice %23 {offsets = [0, 32], sizes = [16, 32], strides = [1, 1]} : vector<16x96xf32> to vector<16x32xf32>
    %26 = vector.extract_strided_slice %23 {offsets = [0, 64], sizes = [16, 32], strides = [1, 1]} : vector<16x96xf32> to vector<16x32xf32>
    %cst_12 = arith.constant dense<0.000000e+00> : vector<16x16xf32>
    %27 = tpu.matmul %24, %25, %cst_12 {dimension_numbers = #tpu.dot_dimension_numbers<[1], [1], [0], [0], [0, 0, 1, 0], [], []>} : vector<16x32xf32>, vector<16x32xf32>, vector<16x16xf32> -> vector<16x16xf32>
    %c0_13 = arith.constant 0 : index
    %c0_14 = arith.constant 0 : index
    %28 = vector.load %arg8[%c0_13, %c0_14] : memref<16x16xf32, #tpu.memory_space<vmem>>, vector<16x16xf32>
    %29 = arith.addf %27, %28 : vector<16x16xf32>
    %cst_15 = arith.constant dense<0xFF800000> : vector<16xf32>
    %30 = vector.multi_reduction <maximumf>, %29, %cst_15 [1] : vector<16x16xf32> to vector<16xf32>
    %31 = vector.shape_cast %30 : vector<16xf32> to vector<16x1xf32>
    %32 = vector.broadcast %31 : vector<16x1xf32> to vector<16x16xf32>
    %33 = arith.subf %29, %32 : vector<16x16xf32>
    %34 = math.exp %33 : vector<16x16xf32>
    %cst_16 = arith.constant dense<0.000000e+00> : vector<16xf32>
    %35 = vector.multi_reduction <add>, %34, %cst_16 [1] : vector<16x16xf32> to vector<16xf32>
    %36 = vector.shape_cast %35 : vector<16xf32> to vector<16x1xf32>
    %37 = tpu.reciprocal %36 {approx = true} : vector<16x1xf32> -> vector<16x1xf32>
    %38 = vector.broadcast %37 : vector<16x1xf32> to vector<16x16xf32>
    %39 = arith.mulf %34, %38 : vector<16x16xf32>
    %cst_17 = arith.constant dense<0.000000e+00> : vector<16x32xf32>
    %40 = tpu.matmul %39, %26, %cst_17 {dimension_numbers = #tpu.dot_dimension_numbers<[1], [0], [0], [1], [0, 0, 1, 1], [], []>} : vector<16x16xf32>, vector<16x32xf32>, vector<16x32xf32> -> vector<16x32xf32>
    %c0_18 = arith.constant 0 : index
    %c0_19 = arith.constant 0 : index
    %41 = vector.load %arg4[%c0_18, %c0_19] : memref<32x32xf32, #tpu.memory_space<vmem>>, vector<32x32xf32>
    %cst_20 = arith.constant dense<0.000000e+00> : vector<16x32xf32>
    %42 = tpu.matmul %40, %41, %cst_20 {dimension_numbers = #tpu.dot_dimension_numbers<[1], [0], [0], [1], [0, 0, 1, 1], [], []>} : vector<16x32xf32>, vector<32x32xf32>, vector<16x32xf32> -> vector<16x32xf32>
    %43 = vector.broadcast %2 : vector<1x32xf32> to vector<16x32xf32>
    %44 = arith.addf %42, %43 : vector<16x32xf32>
    %45 = arith.addf %19, %44 : vector<16x32xf32>
    %cst_21 = arith.constant dense<0.000000e+00> : vector<16xf32>
    %46 = vector.multi_reduction <add>, %45, %cst_21 [1] : vector<16x32xf32> to vector<16xf32>
    %47 = vector.shape_cast %46 : vector<16xf32> to vector<16x1xf32>
    %48 = arith.mulf %45, %45 : vector<16x32xf32>
    %cst_22 = arith.constant dense<0.000000e+00> : vector<16xf32>
    %49 = vector.multi_reduction <add>, %48, %cst_22 [1] : vector<16x32xf32> to vector<16xf32>
    %50 = vector.shape_cast %49 : vector<16xf32> to vector<16x1xf32>
    %cst_23 = arith.constant 3.125000e-02 : f32
    %51 = vector.broadcast %cst_23 : f32 to vector<16x1xf32>
    %52 = arith.mulf %47, %51 : vector<16x1xf32>
    %cst_24 = arith.constant 3.125000e-02 : f32
    %53 = vector.broadcast %cst_24 : f32 to vector<16x1xf32>
    %54 = arith.mulf %50, %53 : vector<16x1xf32>
    %55 = arith.mulf %52, %52 : vector<16x1xf32>
    %56 = arith.subf %54, %55 : vector<16x1xf32>
    %57 = vector.broadcast %52 : vector<16x1xf32> to vector<16x32xf32>
    %58 = arith.subf %45, %57 : vector<16x32xf32>
    %cst_25 = arith.constant 9.99999996E-13 : f32
    %59 = vector.broadcast %cst_25 : f32 to vector<16x1xf32>
    %60 = arith.addf %56, %59 : vector<16x1xf32>
    %61 = math.rsqrt %60 : vector<16x1xf32>
    %62 = vector.broadcast %61 : vector<16x1xf32> to vector<16x32xf32>
    %63 = arith.mulf %58, %62 : vector<16x32xf32>
    %64 = vector.broadcast %3 : vector<1x32xf32> to vector<16x32xf32>
    %65 = arith.mulf %63, %64 : vector<16x32xf32>
    %66 = vector.broadcast %4 : vector<1x32xf32> to vector<16x32xf32>
    %67 = arith.addf %65, %66 : vector<16x32xf32>
    %c0_26 = arith.constant 0 : index
    %c0_27 = arith.constant 0 : index
    %68 = vector.load %arg5[%c0_26, %c0_27] : memref<32x128xf32, #tpu.memory_space<vmem>>, vector<32x128xf32>
    %cst_28 = arith.constant dense<0.000000e+00> : vector<16x128xf32>
    %69 = tpu.matmul %67, %68, %cst_28 {dimension_numbers = #tpu.dot_dimension_numbers<[1], [0], [0], [1], [0, 0, 1, 1], [], []>} : vector<16x32xf32>, vector<32x128xf32>, vector<16x128xf32> -> vector<16x128xf32>
    %70 = vector.broadcast %5 : vector<1x128xf32> to vector<16x128xf32>
    %71 = arith.addf %69, %70 : vector<16x128xf32>
    %72 = arith.mulf %71, %71 : vector<16x128xf32>
    %73 = arith.mulf %71, %72 : vector<16x128xf32>
    %cst_29 = arith.constant 4.471500e-02 : f32
    %74 = vector.broadcast %cst_29 : f32 to vector<16x128xf32>
    %75 = arith.mulf %74, %73 : vector<16x128xf32>
    %76 = arith.addf %71, %75 : vector<16x128xf32>
    %cst_30 = arith.constant 0.797884583 : f32
    %77 = vector.broadcast %cst_30 : f32 to vector<16x128xf32>
    %78 = arith.mulf %77, %76 : vector<16x128xf32>
    %79 = math.tanh %78 : vector<16x128xf32>
    %cst_31 = arith.constant 1.000000e+00 : f32
    %80 = vector.broadcast %cst_31 : f32 to vector<16x128xf32>
    %81 = arith.addf %80, %79 : vector<16x128xf32>
    %cst_32 = arith.constant 5.000000e-01 : f32
    %82 = vector.broadcast %cst_32 : f32 to vector<16x128xf32>
    %83 = arith.mulf %82, %81 : vector<16x128xf32>
    %84 = arith.mulf %71, %83 : vector<16x128xf32>
    %c0_33 = arith.constant 0 : index
    %c0_34 = arith.constant 0 : index
    %85 = vector.load %arg6[%c0_33, %c0_34] : memref<128x32xf32, #tpu.memory_space<vmem>>, vector<128x32xf32>
    %cst_35 = arith.constant dense<0.000000e+00> : vector<16x32xf32>
    %86 = tpu.matmul %84, %85, %cst_35 {dimension_numbers = #tpu.dot_dimension_numbers<[1], [0], [0], [1], [0, 0, 1, 1], [], []>} : vector<16x128xf32>, vector<128x32xf32>, vector<16x32xf32> -> vector<16x32xf32>
    %87 = vector.broadcast %6 : vector<1x32xf32> to vector<16x32xf32>
    %88 = arith.addf %86, %87 : vector<16x32xf32>
    %89 = arith.addf %67, %88 : vector<16x32xf32>
    %cst_36 = arith.constant dense<0.000000e+00> : vector<16xf32>
    %90 = vector.multi_reduction <add>, %89, %cst_36 [1] : vector<16x32xf32> to vector<16xf32>
    %91 = vector.shape_cast %90 : vector<16xf32> to vector<16x1xf32>
    %92 = arith.mulf %89, %89 : vector<16x32xf32>
    %cst_37 = arith.constant dense<0.000000e+00> : vector<16xf32>
    %93 = vector.multi_reduction <add>, %92, %cst_37 [1] : vector<16x32xf32> to vector<16xf32>
    %94 = vector.shape_cast %93 : vector<16xf32> to vector<16x1xf32>
    %cst_38 = arith.constant 3.125000e-02 : f32
    %95 = vector.broadcast %cst_38 : f32 to vector<16x1xf32>
    %96 = arith.mulf %91, %95 : vector<16x1xf32>
    %cst_39 = arith.constant 3.125000e-02 : f32
    %97 = vector.broadcast %cst_39 : f32 to vector<16x1xf32>
    %98 = arith.mulf %94, %97 : vector<16x1xf32>
    %99 = arith.mulf %96, %96 : vector<16x1xf32>
    %100 = arith.subf %98, %99 : vector<16x1xf32>
    %101 = vector.broadcast %96 : vector<16x1xf32> to vector<16x32xf32>
    %102 = arith.subf %89, %101 : vector<16x32xf32>
    %cst_40 = arith.constant 9.99999996E-13 : f32
    %103 = vector.broadcast %cst_40 : f32 to vector<16x1xf32>
    %104 = arith.addf %100, %103 : vector<16x1xf32>
    %105 = math.rsqrt %104 : vector<16x1xf32>
    %106 = vector.broadcast %105 : vector<16x1xf32> to vector<16x32xf32>
    %107 = arith.mulf %102, %106 : vector<16x32xf32>
    %108 = vector.broadcast %7 : vector<1x32xf32> to vector<16x32xf32>
    %109 = arith.mulf %107, %108 : vector<16x32xf32>
    %110 = vector.broadcast %8 : vector<1x32xf32> to vector<16x32xf32>
    %111 = arith.addf %109, %110 : vector<16x32xf32>
    %c0_41 = arith.constant 0 : index
    %c0_42 = arith.constant 0 : index
    %112 = vector.load %arg9[%c0_41, %c0_42] : memref<16x32xf32, #tpu.memory_space<vmem>>, vector<16x32xf32>
    tpu.vector_store %arg9[%c0_41, %c0_42], %111 {strides = array<i32>} : memref<16x32xf32, #tpu.memory_space<vmem>>, vector<16x32xf32>,
    return
  }
}

</mosaic_0001>

<llo_original>
// kernel: tpu_custom_call.1
$region0: #{tpu_custom_call.1}
  #allocation0 [shape = 'u32[]', space=smem, size = 0x4, offset = 0x4, fixed_abs, tag = 'smem constant byte address 0x4 - core index']
  #allocation1 [shape = 'u32[72,128]{1,0:T(1,128)}', space=vmem, size = 0x9000, scoped, tag = 'internal scratch']
  %s0 = inlined_call_operand.vmem [shape: s32[16,1], index: 0, kind: input, shape index: {}]
  %s1 = inlined_call_operand.vmem [shape: f32[64,32], index: 1, kind: input, shape index: {}]
  %s2 = inlined_call_operand.vmem [shape: f32[16,32], index: 2, kind: input, shape index: {}]
  %s3 = inlined_call_operand.vmem [shape: f32[32,96], index: 3, kind: input, shape index: {}]
  %s4 = inlined_call_operand.vmem [shape: f32[32,32], index: 4, kind: input, shape index: {}]
  %s5 = inlined_call_operand.vmem [shape: f32[32,128], index: 5, kind: input, shape index: {}]
  %s6 = inlined_call_operand.vmem [shape: f32[128,32], index: 6, kind: input, shape index: {}]
  %s7 = inlined_call_operand.vmem [shape: f32[8,128], index: 7, kind: input, shape index: {}]
  %s8 = inlined_call_operand.vmem [shape: f32[16,16], index: 8, kind: input, shape index: {}]
  %s9 = inlined_call_operand.hbm [shape: f32[16,32], index: 9, kind: output, shape index: {}]
  %s10 = sld [smem:[#allocation0]]
  $region46: #{tpu_custom_call.1} parent=0
    _
  %s12 = ssub.s32 1, %s10
  %s13 = scalar_select 0, %s12, %s10
  $region1: #{tpu_custom_call.1} parent=0
    #allocation2 [shape = 'u8[8192]{0}', space=vmem, size = 0x2000, scoped, tag = 'output window, operand 0, single buffered']
    #allocation3 [shape = 's32[1]{0}', space=sflag, size = 0x4, scoped, tag = 'scoped memory for tpu_custom_call.1']
    %14 = vsyncpa [#allocation3], 0
    // Predicated region
    $region2: #{tpu_custom_call.1} parent=1 // pred_check
      _
    $region3: #{tpu_custom_call.1} parent=1 // pred_check_branch
      %16 = sbr.rel (0) target = $region5
    $region4: #{tpu_custom_call.1} parent=1 // pred_region
      _
    $region5: #{tpu_custom_call.1} parent=1 // pred_fallthru
      _
    // Predicated region
    $region6: #{tpu_custom_call.1} parent=1 // pred_check
      _
    $region7: #{tpu_custom_call.1} parent=1 // pred_check_branch
      %18 = sbr.rel (0) target = $region9
    $region8: #{tpu_custom_call.1} parent=1 // pred_region
      _
    $region9: #{tpu_custom_call.1} parent=1 // pred_fallthru
      _
    // Predicated region
    $region10: #{tpu_custom_call.1} parent=1 // pred_check
      _
    $region11: #{tpu_custom_call.1} parent=1 // pred_check_branch
      %20 = sbr.rel (0) target = $region13
    $region12: #{tpu_custom_call.1} parent=1 // pred_region
      _
    $region13: #{tpu_custom_call.1} parent=1 // pred_fallthru
      _
    // Predicated region
    $region14: #{tpu_custom_call.1} parent=1 // pred_check
      _
    $region15: #{tpu_custom_call.1} parent=1 // pred_check_branch
      %22 = sbr.rel (0) target = $region17
    $region16: #{tpu_custom_call.1} parent=1 // pred_region
      _
    $region17: #{tpu_custom_call.1} parent=1 // pred_fallthru
      _
    // Predicated region
    $region18: #{tpu_custom_call.1} parent=1 // pred_check
      _
    $region19: #{tpu_custom_call.1} parent=1 // pred_check_branch
      %24 = sbr.rel (0) target = $region21
    $region20: #{tpu_custom_call.1} parent=1 // pred_region
      _
    $region21: #{tpu_custom_call.1} parent=1 // pred_fallthru
      _
    // Predicated region
    $region22: #{tpu_custom_call.1} parent=1 // pred_check
      _
    $region23: #{tpu_custom_call.1} parent=1 // pred_check_branch
      %26 = sbr.rel (0) target = $region25
    $region24: #{tpu_custom_call.1} parent=1 // pred_region
      _
    $region25: #{tpu_custom_call.1} parent=1 // pred_fallthru
      _
    // Predicated region
    $region26: #{tpu_custom_call.1} parent=1 // pred_check
      _
    $region27: #{tpu_custom_call.1} parent=1 // pred_check_branch
      %28 = sbr.rel (0) target = $region29
    $region28: #{tpu_custom_call.1} parent=1 // pred_region
      _
    $region29: #{tpu_custom_call.1} parent=1 // pred_fallthru
      _
    // Predicated region
    $region30: #{tpu_custom_call.1} parent=1 // pred_check
      _
    $region31: #{tpu_custom_call.1} parent=1 // pred_check_branch
      %30 = sbr.rel (0) target = $region33
    $region32: #{tpu_custom_call.1} parent=1 // pred_region
      _
    $region33: #{tpu_custom_call.1} parent=1 // pred_fallthru
      _
    // Predicated region
    $region34: #{tpu_custom_call.1} parent=1 // pred_check
      _
    $region35: #{tpu_custom_call.1} parent=1 // pred_check_branch
      %32 = sbr.rel (0) target = $region37
    $region36: #{tpu_custom_call.1} parent=1 // pred_region
      _
    $region37: #{tpu_custom_call.1} parent=1 // pred_fallthru
      _
    %v33 = vld [vmem:[%s7] sm:$0xff]
    %v34 = vld [vmem:[%s0] sm:$0xff]
    %v35 = vld [vmem:[%s0 + $0x8] sm:$0xff]
    %v36 = vlaneseq
    %v37 = vand.u32 %v36, 127
    %38 = vset.pattern.permute.xlu0 0
    %39 = vperm.xlu0 %38, %v34
    %v40 = vpop.permute.xlu0 %39
    %41 = vset.pattern.permute.xlu0 0
    %42 = vperm.xlu0 %41, %v35
    %v43 = vpop.permute.xlu0 %42
    %vm44 = vcmp.eq.s32.totalorder %v37, %v40
    %vm45 = vcmp.eq.s32.totalorder %v37, %v43
    %v46 = vsel %vm44, 1.0, 0.0
    %v47 = vsel %vm45, 1.0, 0.0
    %v48 = vld [vmem:[%s1] sm:$0xff]
    %v49 = vld [vmem:[%s1 + $0x8] sm:$0xff]
    %v50 = vld [vmem:[%s1 + $0x10] sm:$0xff]
    %v51 = vld [vmem:[%s1 + $0x18] sm:$0xff]
    %v52 = vld [vmem:[%s1 + $0x20] sm:$0xff]
    %v53 = vld [vmem:[%s1 + $0x28] sm:$0xff]
    %v54 = vld [vmem:[%s1 + $0x30] sm:$0xff]
    %v55 = vld [vmem:[%s1 + $0x38] sm:$0xff]
    %v56 = vld [vmem:[%s2] sm:$0xff]
    %v57 = vld [vmem:[%s2 + $0x8] sm:$0xff]
    %vm58 = vcmask 523264
    %v60 = vsel %vm58, %v46, 0
    %v63 = vsel %vm58, %v47, 0
    %65 = vmatpush.msra.mxu0 0.0
    %66 = vmatpush.msra.mxu0 0.0
    %67 = vmatpush.msra.mxu0 0.0
    %68 = vmatpush.msra.mxu0 0.0
    %69 = vmatpush.msra.mxu0 0.0
    %70 = vmatpush.msra.mxu0 0.0
    %71 = vmatpush.msra.mxu0 0.0
    %72 = vmatpush.msra.mxu0 0.0
    %73 = vmatpush.msra.mxu0 %v55
    %74 = vmatpush.msra.mxu0 %v54
    %75 = vmatpush.msra.mxu0 %v53
    %76 = vmatpush.msra.mxu0 %v52
    %77 = vmatpush.msra.mxu0 %v51
    %78 = vmatpush.msra.mxu0 %v50
    %79 = vmatpush.msra.mxu0 %v49
    %80 = vmatpush.msra.mxu0 %v48
    %81 = vmatmul.f32.gmra.mxu0 %v60
    %v82 = vpop.f32.mrf.mxu0
    %v83 = vadd.f32 %v56, %v82
    %84 = vmatmul.f32.gmra.mxu0 %v63
    %v85 = vpop.f32.mrf.mxu0
    %v86 = vadd.f32 %v57, %v85
    %87 = vdwg.mxu0
    %v88 = vld [vmem:[%s3] sm:$0xff]
    %v89 = vld [vmem:[%s3 + $0x8] sm:$0xff]
    %v90 = vld [vmem:[%s3 + $0x10] sm:$0xff]
    %v91 = vld [vmem:[%s3 + $0x18] sm:$0xff]
    %v92 = vperm.slane %v33, 0
    %vm93 = vcmask 261120
    %v95 = vsel %vm93, %v83, 0
    %v98 = vsel %vm93, %v86, 0
    %100 = vmatpush.msra.mxu0 0.0
    %101 = vmatpush.msra.mxu0 0.0
    %102 = vmatpush.msra.mxu0 0.0
    %103 = vmatpush.msra.mxu0 0.0
    %104 = vmatpush.msra.mxu0 0.0
    %105 = vmatpush.msra.mxu0 0.0
    %106 = vmatpush.msra.mxu0 0.0
    %107 = vmatpush.msra.mxu0 0.0
    %108 = vmatpush.msra.mxu0 0.0
    %109 = vmatpush.msra.mxu0 0.0
    %110 = vmatpush.msra.mxu0 0.0
    %111 = vmatpush.msra.mxu0 0.0
    %112 = vmatpush.msra.mxu0 %v91
    %113 = vmatpush.msra.mxu0 %v90
    %114 = vmatpush.msra.mxu0 %v89
    %115 = vmatpush.msra.mxu0 %v88
    %116 = vmatmul.f32.gmra.mxu0 %v95
    %v117 = vpop.f32.mrf.mxu0
    %v118 = vadd.f32 %v92, %v117
    %119 = vmatmul.f32.gmra.mxu0 %v98
    %v120 = vpop.f32.mrf.mxu0
    %v121 = vadd.f32 %v92, %v120
    %122 = vdwg.mxu0
    %v123 = vld [vmem:[%s8] sm:$0xff]
    %v124 = vld [vmem:[%s8 + $0x8] sm:$0xff]
    %127 = vrot.lane.b32.xlu0 %v118, 96
    %v128 = vpop.permute.xlu0 %127
    %129 = vrot.lane.b32.xlu0 %v121, 96
    %v130 = vpop.permute.xlu0 %129
    %v131 = vsel %vm93, %v118, 0
    %v133 = vsel %vm93, %v121, 0
    %v135 = vsel %vm93, %v128, 0
    %v137 = vsel %vm93, %v130, 0
    %139 = vmatpush.xpose.msra.mxu0 0.0
    %140 = vmatpush.xpose.msra.mxu0 0.0
    %141 = vmatpush.xpose.msra.mxu0 0.0
    %142 = vmatpush.xpose.msra.mxu0 0.0
    %143 = vmatpush.xpose.msra.mxu0 0.0
    %144 = vmatpush.xpose.msra.mxu0 0.0
    %145 = vmatpush.xpose.msra.mxu0 0.0
    %146 = vmatpush.xpose.msra.mxu0 0.0
    %147 = vmatpush.xpose.msra.mxu0 0.0
    %148 = vmatpush.xpose.msra.mxu0 0.0
    %149 = vmatpush.xpose.msra.mxu0 0.0
    %150 = vmatpush.xpose.msra.mxu0 0.0
    %151 = vmatpush.xpose.msra.mxu0 0.0
    %152 = vmatpush.xpose.msra.mxu0 0.0
    %153 = vmatpush.xpose.msra.mxu0 %v137
    %154 = vmatpush.xpose.msra.mxu0 %v135
    %155 = vmatmul.f32.gmra.mxu0 %v131
    %v156 = vpop.f32.mrf.mxu0
    %v157 = vadd.f32 %v123, %v156
    %158 = vmatmul.f32.gmra.mxu0 %v133
    %v159 = vpop.f32.mrf.mxu0
    %v160 = vadd.f32 %v124, %v159
    %161 = vdwg.mxu0
    %vm162 = vcmask 130048
    %v163 = vsel %vm162, %v157, -inf
    %164 = vmax.xlane.f32.xlu0 %v163
    %v165 = vpop.xlane.xlu0 %164
    %v166 = vsel %vm162, %v160, -inf
    %167 = vmax.xlane.f32.xlu0 %v166
    %v168 = vpop.xlane.xlu0 %167
    %v169 = vsub.f32 %v157, %v165
    %v170 = vsub.f32 %v160, %v168
    %v171 = vmul.f32 %v169, 1.442695
    %v172 = vpow.pop %v171
    %v173 = vmul.f32 %v170, 1.442695
    %v174 = vpow.pop %v173
    %v175 = vsel %vm162, %v172, 0.0
    %176 = vadd.xlane.f32.xlu0 %v175
    %v177 = vpop.xlane.xlu0 %176
    %v178 = vsel %vm162, %v174, 0.0
    %179 = vadd.xlane.f32.xlu0 %v178
    %v180 = vpop.xlane.xlu0 %179
    %v181 = vrcp.pop %v177
    %v182 = vrcp.pop %v180
    %v183 = vmul.f32 %v172, %v181
    %v184 = vmul.f32 %v174, %v182
    %185 = vrot.lane.b32.xlu0 %v118, 64
    %v186 = vpop.permute.xlu0 %185
    %187 = vrot.lane.b32.xlu0 %v121, 64
    %v188 = vpop.permute.xlu0 %187
    %v192 = vsel %vm162, %v183, 0
    %v195 = vsel %vm162, %v184, 0
    %197 = vmatpush.msra.mxu0 0.0
    %198 = vmatpush.msra.mxu0 0.0
    %199 = vmatpush.msra.mxu0 0.0
    %200 = vmatpush.msra.mxu0 0.0
    %201 = vmatpush.msra.mxu0 0.0
    %202 = vmatpush.msra.mxu0 0.0
    %203 = vmatpush.msra.mxu0 0.0
    %204 = vmatpush.msra.mxu0 0.0
    %205 = vmatpush.msra.mxu0 0.0
    %206 = vmatpush.msra.mxu0 0.0
    %207 = vmatpush.msra.mxu0 0.0
    %208 = vmatpush.msra.mxu0 0.0
    %209 = vmatpush.msra.mxu0 0.0
    %210 = vmatpush.msra.mxu0 0.0
    %211 = vmatpush.msra.mxu0 %v188
    %212 = vmatpush.msra.mxu0 %v186
    %213 = vmatmul.f32.gmra.mxu0 %v192
    %v214 = vpop.f32.mrf.mxu0
    %v215 = vadd.f32 0.0, %v214
    %216 = vmatmul.f32.gmra.mxu0 %v195
    %v217 = vpop.f32.mrf.mxu0
    %v218 = vadd.f32 0.0, %v217
    %219 = vdwg.mxu0
    %v220 = vld [vmem:[%s4] sm:$0xff]
    %v221 = vld [vmem:[%s4 + $0x8] sm:$0xff]
    %v222 = vld [vmem:[%s4 + $0x10] sm:$0xff]
    %v223 = vld [vmem:[%s4 + $0x18] sm:$0xff]
    %v224 = vperm.slane %v33, 1
    %v226 = vsel %vm93, %v215, 0
    %v229 = vsel %vm93, %v218, 0
    %231 = vmatpush.msra.mxu0 0.0
    %232 = vmatpush.msra.mxu0 0.0
    %233 = vmatpush.msra.mxu0 0.0
    %234 = vmatpush.msra.mxu0 0.0
    %235 = vmatpush.msra.mxu0 0.0
    %236 = vmatpush.msra.mxu0 0.0
    %237 = vmatpush.msra.mxu0 0.0
    %238 = vmatpush.msra.mxu0 0.0
    %239 = vmatpush.msra.mxu0 0.0
    %240 = vmatpush.msra.mxu0 0.0
    %241 = vmatpush.msra.mxu0 0.0
    %242 = vmatpush.msra.mxu0 0.0
    %243 = vmatpush.msra.mxu0 %v223
    %244 = vmatpush.msra.mxu0 %v222
    %245 = vmatpush.msra.mxu0 %v221
    %246 = vmatpush.msra.mxu0 %v220
    %247 = vmatmul.f32.gmra.mxu0 %v226
    %v248 = vpop.f32.mrf.mxu0
    %v249 = vadd.f32 %v224, %v248
    %250 = vmatmul.f32.gmra.mxu0 %v229
    %v251 = vpop.f32.mrf.mxu0
    %v252 = vadd.f32 %v224, %v251
    %253 = vdwg.mxu0
    %v254 = vadd.f32 %v83, %v249
    %v255 = vadd.f32 %v86, %v252
    %v256 = vsel %vm93, %v254, 0.0
    %257 = vadd.xlane.f32.xlu0 %v256
    %v258 = vpop.xlane.xlu0 %257
    %v259 = vsel %vm93, %v255, 0.0
    %260 = vadd.xlane.f32.xlu0 %v259
    %v261 = vpop.xlane.xlu0 %260
    %v262 = vmul.f32 %v254, %v254
    %v263 = vmul.f32 %v255, %v255
    %v264 = vsel %vm93, %v262, 0.0
    %265 = vadd.xlane.f32.xlu0 %v264
    %v266 = vpop.xlane.xlu0 %265
    %v267 = vsel %vm93, %v263, 0.0
    %268 = vadd.xlane.f32.xlu0 %v267
    %v269 = vpop.xlane.xlu0 %268
    %v270 = vmul.f32 %v258, 0.03125
    %v271 = vmul.f32 %v261, 0.03125
    %v272 = vmul.f32 %v266, 0.03125
    %v273 = vmul.f32 %v269, 0.03125
    %v274 = vmul.f32 %v270, %v270
    %v275 = vmul.f32 %v271, %v271
    %v276 = vsub.f32 %v272, %v274
    %v277 = vsub.f32 %v273, %v275
    %v278 = vsub.f32 %v254, %v270
    %v279 = vsub.f32 %v255, %v271
    %v280 = vadd.f32 %v276, 1e-12
    %v281 = vadd.f32 %v277, 1e-12
    %v282 = vrsqrt.pop %v280
    %v283 = vmul.f32 %v282, %v280
    %v284 = vmul.f32 %v283, %v282
    %v285 = vmul.f32 0.5, %v284
    %v286 = vsub.f32 1.5, %v285
    %v287 = vmul.f32 %v282, %v286
    %vm288 = vweird.f32 %v280
    %vm289 = vweird.f32 %v282
    %vm290 = vmor %vm288, %vm289
    %v291 = vsel %vm290, %v282, %v287
    %v292 = vrsqrt.pop %v281
    %v293 = vmul.f32 %v292, %v281
    %v294 = vmul.f32 %v293, %v292
    %v295 = vmul.f32 0.5, %v294
    %v296 = vsub.f32 1.5, %v295
    %v297 = vmul.f32 %v292, %v296
    %vm298 = vweird.f32 %v281
    %vm299 = vweird.f32 %v292
    %vm300 = vmor %vm298, %vm299
    %v301 = vsel %vm300, %v292, %v297
    %v302 = vmul.f32 %v278, %v291
    %v303 = vmul.f32 %v279, %v301
    %v304 = vperm.slane %v33, 2
    %v305 = vmul.f32 %v302, %v304
    %v306 = vmul.f32 %v303, %v304
    %v307 = vperm.slane %v33, 3
    %v308 = vadd.f32 %v305, %v307
    %v309 = vadd.f32 %v306, %v307
    %v310 = vld [vmem:[%s5] sm:$0xff]
    %v311 = vld [vmem:[%s5 + $0x8] sm:$0xff]
    %v312 = vld [vmem:[%s5 + $0x10] sm:$0xff]
    %v313 = vld [vmem:[%s5 + $0x18] sm:$0xff]
    %v314 = vperm.slane %v33, 4
    %v316 = vsel %vm93, %v308, 0
    %v319 = vsel %vm93, %v309, 0
    %321 = vmatpush.msra.mxu0 0.0
    %322 = vmatpush.msra.mxu0 0.0
    %323 = vmatpush.msra.mxu0 0.0
    %324 = vmatpush.msra.mxu0 0.0
    %325 = vmatpush.msra.mxu0 0.0
    %326 = vmatpush.msra.mxu0 0.0
    %327 = vmatpush.msra.mxu0 0.0
    %328 = vmatpush.msra.mxu0 0.0
    %329 = vmatpush.msra.mxu0 0.0
    %330 = vmatpush.msra.mxu0 0.0
    %331 = vmatpush.msra.mxu0 0.0
    %332 = vmatpush.msra.mxu0 0.0
    %333 = vmatpush.msra.mxu0 %v313
    %334 = vmatpush.msra.mxu0 %v312
    %335 = vmatpush.msra.mxu0 %v311
    %336 = vmatpush.msra.mxu0 %v310
    %337 = vmatmul.f32.gmra.mxu0 %v316
    %v338 = vpop.f32.mrf.mxu0
    %v339 = vadd.f32 %v314, %v338
    %340 = vmatmul.f32.gmra.mxu0 %v319
    %v341 = vpop.f32.mrf.mxu0
    %v342 = vadd.f32 %v314, %v341
    %343 = vdwg.mxu0
    %v344 = vmul.f32 %v339, %v339
    %v345 = vmul.f32 %v342, %v342
    %v346 = vmul.f32 %v339, %v344
    %v347 = vmul.f32 %v342, %v345
    %v348 = vmul.f32 %v346, 0.044715
    %v349 = vmul.f32 %v347, 0.044715
    %v350 = vadd.f32 %v339, %v348
    %v351 = vadd.f32 %v342, %v349
    %v352 = vmul.f32 %v350, 0.7978846
    %v353 = vmul.f32 %v351, 0.7978846
    %v354 = vtanh.pop %v352
    %v355 = vtanh.pop %v353
    %v356 = vadd.f32 %v354, 1.0
    %v357 = vadd.f32 %v355, 1.0
    %v358 = vmul.f32 %v356, 0.5
    %v359 = vmul.f32 %v357, 0.5
    %v360 = vmul.f32 %v339, %v358
    %v361 = vmul.f32 %v342, %v359
    %v362 = vld [vmem:[%s6] sm:$0xff]
    %v363 = vld [vmem:[%s6 + $0x8] sm:$0xff]
    %v364 = vld [vmem:[%s6 + $0x10] sm:$0xff]
    %v365 = vld [vmem:[%s6 + $0x18] sm:$0xff]
    %v366 = vld [vmem:[%s6 + $0x20] sm:$0xff]
    %v367 = vld [vmem:[%s6 + $0x28] sm:$0xff]
    %v368 = vld [vmem:[%s6 + $0x30] sm:$0xff]
    %v369 = vld [vmem:[%s6 + $0x38] sm:$0xff]
    %v370 = vld [vmem:[%s6 + $0x40] sm:$0xff]
    %v371 = vld [vmem:[%s6 + $0x48] sm:$0xff]
    %v372 = vld [vmem:[%s6 + $0x50] sm:$0xff]
    %v373 = vld [vmem:[%s6 + $0x58] sm:$0xff]
    %v374 = vld [vmem:[%s6 + $0x60] sm:$0xff]
    %v375 = vld [vmem:[%s6 + $0x68] sm:$0xff]
    %v376 = vld [vmem:[%s6 + $0x70] sm:$0xff]
    %v377 = vld [vmem:[%s6 + $0x78] sm:$0xff]
    %v378 = vperm.slane %v33, 5
    %379 = vmatpush.msra.mxu0 %v377
    %380 = vmatpush.msra.mxu0 %v376
    %381 = vmatpush.msra.mxu0 %v375
    %382 = vmatpush.msra.mxu0 %v374
    %383 = vmatpush.msra.mxu0 %v373
    %384 = vmatpush.msra.mxu0 %v372
    %385 = vmatpush.msra.mxu0 %v371
    %386 = vmatpush.msra.mxu0 %v370
    %387 = vmatpush.msra.mxu0 %v369
    %388 = vmatpush.msra.mxu0 %v368
    %389 = vmatpush.msra.mxu0 %v367
    %390 = vmatpush.msra.mxu0 %v366
    %391 = vmatpush.msra.mxu0 %v365
    %392 = vmatpush.msra.mxu0 %v364
    %393 = vmatpush.msra.mxu0 %v363
    %394 = vmatpush.msra.mxu0 %v362
    %395 = vmatmul.f32.gmra.mxu0 %v360
    %v396 = vpop.f32.mrf.mxu0
    %v397 = vadd.f32 %v378, %v396
    %398 = vmatmul.f32.gmra.mxu0 %v361
    %v399 = vpop.f32.mrf.mxu0
    %v400 = vadd.f32 %v378, %v399
    %401 = vdwg.mxu0
    %v402 = vadd.f32 %v308, %v397
    %v403 = vadd.f32 %v309, %v400
    %v404 = vsel %vm93, %v402, 0.0
    %405 = vadd.xlane.f32.xlu0 %v404
    %v406 = vpop.xlane.xlu0 %405
    %v407 = vsel %vm93, %v403, 0.0
    %408 = vadd.xlane.f32.xlu0 %v407
    %v409 = vpop.xlane.xlu0 %408
    %v410 = vmul.f32 %v402, %v402
    %v411 = vmul.f32 %v403, %v403
    %v412 = vsel %vm93, %v410, 0.0
    %413 = vadd.xlane.f32.xlu0 %v412
    %v414 = vpop.xlane.xlu0 %413
    %v415 = vsel %vm93, %v411, 0.0
    %416 = vadd.xlane.f32.xlu0 %v415
    %v417 = vpop.xlane.xlu0 %416
    %v418 = vmul.f32 %v406, 0.03125
    %v419 = vmul.f32 %v409, 0.03125
    %v420 = vmul.f32 %v414, 0.03125
    %v421 = vmul.f32 %v417, 0.03125
    %v422 = vmul.f32 %v418, %v418
    %v423 = vmul.f32 %v419, %v419
    %v424 = vsub.f32 %v420, %v422
    %v425 = vsub.f32 %v421, %v423
    %v426 = vsub.f32 %v402, %v418
    %v427 = vsub.f32 %v403, %v419
    %v428 = vadd.f32 %v424, 1e-12
    %v429 = vadd.f32 %v425, 1e-12
    %v430 = vrsqrt.pop %v428
    %v431 = vmul.f32 %v430, %v428
    %v432 = vmul.f32 %v431, %v430
    %v433 = vmul.f32 0.5, %v432
    %v434 = vsub.f32 1.5, %v433
    %v435 = vmul.f32 %v430, %v434
    %vm436 = vweird.f32 %v428
    %vm437 = vweird.f32 %v430
    %vm438 = vmor %vm436, %vm437
    %v439 = vsel %vm438, %v430, %v435
    %v440 = vrsqrt.pop %v429
    %v441 = vmul.f32 %v440, %v429
    %v442 = vmul.f32 %v441, %v440
    %v443 = vmul.f32 0.5, %v442
    %v444 = vsub.f32 1.5, %v443
    %v445 = vmul.f32 %v440, %v444
    %vm446 = vweird.f32 %v429
    %vm447 = vweird.f32 %v440
    %vm448 = vmor %vm446, %vm447
    %v449 = vsel %vm448, %v440, %v445
    %v450 = vmul.f32 %v426, %v439
    %v451 = vmul.f32 %v427, %v449
    %v452 = vperm.slane %v33, 6
    %v453 = vmul.f32 %v450, %v452
    %v454 = vmul.f32 %v451, %v452
    %v455 = vperm.slane %v33, 7
    %v456 = vadd.f32 %v453, %v455
    %v457 = vadd.f32 %v454, %v455
    %458 = vst.msk [vmem:[#allocation2] sm:$0xff] %vm93, %v456
    %459 = vst.msk [vmem:[#allocation2 + $0x8] sm:$0xff] %vm93, %v457
    // Predicated region
    $region38: #{tpu_custom_call.1} parent=1 // pred_check
      _
    $region39: #{tpu_custom_call.1} parent=1 // pred_check_branch
      %461 = sbr.rel (0) target = $region41
    $region40: #{tpu_custom_call.1} parent=1 // pred_region
      %463 = vsyncadd [#allocation3], 0
      %s464 = sshll.u32 [#allocation2], 4
      %s465 = int_to_ptr.vmem [resolvable:$true] %s464
      %s466 = sshll.u32 %s9, 4
      %s467 = int_to_ptr.hbm [resolvable:$true] %s466
      %472 = dma.vmem_to_hbm [thread:$0]  %s465, 256, %s467, [#allocation3], 128, 128, 8
    $region41: #{tpu_custom_call.1} parent=1 // pred_fallthru
      _
    // Predicated region
    $region42: #{tpu_custom_call.1} parent=1 // pred_check
      _
    $region43: #{tpu_custom_call.1} parent=1 // pred_check_branch
      %474 = sbr.rel (0) target = $region45
    $region44: #{tpu_custom_call.1} parent=1 // pred_region
      %476 = dma.done [#allocation3], 256
    $region45: #{tpu_custom_call.1} parent=1 // pred_fallthru
      _
    %477 = vsyncpa [#allocation3], 1

</llo_original>
